<compile_context>
chip_gen: v5e
topology: v5e:2x2
jax: 0.10.0
libtpu: 0.0.40
codegen_flags: <defaults>
</compile_context>

<pallas_src>
import jax
import jax.numpy as jnp
import numpy as np
from jax.experimental import pallas as pl
from jax.experimental.pallas import tpu as pltpu


# ---------------------------------------------------------------------------
# Kernel: batched MXU matmul in native (N, V, C) layout.
# ---------------------------------------------------------------------------
def _gconv_hyper_kernel(at_ref, x_ref, o_ref):
    # at_ref: (V, V)      -- A^T, resident across all grid steps
    # x_ref : (Nb, V, C)  -- native-layout batch tile of x
    # o_ref : (Nb, V, C)  -- native-layout batch tile of the output
    nb, v, _ = x_ref.shape
    at_b = jnp.broadcast_to(at_ref[...][None, :, :], (nb, v, v))
    # out[b, w, c] = sum_v A^T[w, v] * x[b, v, c]   (batched matmul on the MXU)
    acc = jax.lax.dot_general(
        at_b, x_ref[...],
        dimension_numbers=(((2,), (1,)), ((0,), (0,))),
        preferred_element_type=jnp.float32,
    )
    o_ref[...] = acc.astype(o_ref.dtype)


# ---------------------------------------------------------------------------
# Batch-tile selection: VMEM-budget aware, prefers >= 4 grid steps.
# ---------------------------------------------------------------------------
def _pick_batch_tile(N, V, C, itemsize, vmem_budget=24 * 1024 * 1024,
                     min_steps=4):
    """Largest per-step batch tile Nb such that the double-buffered in+out
    blocks fit the VMEM budget, capped so the grid has >= min_steps steps
    whenever N allows it (keeps both v7x TensorCores fed with >= 2 pipelined
    iterations each)."""
    v_pad = -(-V // 8) * 8          # sublane padding
    c_pad = -(-C // 128) * 128      # lane padding
    per_batch_row = v_pad * c_pad * itemsize
    # 2 (double-buffer) * 2 (input block + output block) * Nb * per_batch_row
    nb_budget = max(1, vmem_budget // max(1, 4 * per_batch_row))
    nb = min(N, nb_budget)
    if N >= min_steps:
        nb = min(nb, -(-N // min_steps))
    return max(1, nb)


# ---------------------------------------------------------------------------
# Wrapper: no HBM layout passes on x / out; only the tiny A^T is materialized.
# ---------------------------------------------------------------------------
def gconv_hyper_forward(x, A):
    """out[n, w, c] = sum_v x[n, v, c] * A[v, w]  ==  einsum('nvc,vw->nwc')."""
    N, V, C = x.shape
    assert A.shape == (V, V)

    itemsize = jnp.dtype(x.dtype).itemsize
    # Pre-transpose the (tiny) adjacency so the kernel runs a plain
    # non-transposed batched matmul; V*V elements -> negligible HBM traffic.
    a_t = jnp.transpose(A)

    nb = _pick_batch_tile(N, V, C, itemsize)
    grid = (pl.cdiv(N, nb),)

    cost = pl.CostEstimate(
        flops=2 * N * V * V * C,
        transcendentals=0,
        bytes_accessed=(2 * N * V * C + V * V) * itemsize,
    )

    return pl.pallas_call(
        _gconv_hyper_kernel,
        out_shape=jax.ShapeDtypeStruct((N, V, C), x.dtype),
        grid_spec=pltpu.PrefetchScalarGridSpec(
            num_scalar_prefetch=0,
            grid=grid,
            in_specs=[
                # A^T: constant block index -> fetched once, stays resident.
                pl.BlockSpec((V, V), lambda i: (0, 0)),
                # Native-layout batch tile of x (contiguous HBM chunk).
                pl.BlockSpec((nb, V, C), lambda i: (i, 0, 0)),
            ],
            out_specs=pl.BlockSpec((nb, V, C), lambda i: (i, 0, 0)),
        ),
        compiler_params=pltpu.CompilerParams(
            dimension_semantics=("parallel",),
            # Above the v6e/v7x 32 MiB scoped default, below v7x's 64 MiB
            # physical VMEM; the tile picker keeps the working set <= 24 MiB.
            vmem_limit_bytes=48 * 1024 * 1024,
        ),
        cost_estimate=cost,
    )(a_t, x)


# ---------------------------------------------------------------------------
# Pure-JAX reference (mirrors the PyTorch forward exactly).
# ---------------------------------------------------------------------------
def ref_gconv_hyper(x, A):
    return jnp.einsum('nvc,vw->nwc', x, A)


# ---------------------------------------------------------------------------
if __name__ == "__main__":
    key = jax.random.PRNGKey(0)
    k0, k1 = jax.random.split(key, 2)

    # Small shapes consistent with the module: batch N, nodes V, channels C.
    N, V, C = 8, 16, 32

    x = jax.random.normal(k0, (N, V, C), dtype=jnp.float32)
    A = jax.nn.softmax(jax.random.normal(k1, (V, V), dtype=jnp.float32), axis=-1)

    out = gconv_hyper_forward(x, A)
    out = jax.block_until_ready(out)

    ref = ref_gconv_hyper(x, A)
    np.testing.assert_allclose(np.asarray(out), np.asarray(ref),
                               rtol=1e-5, atol=1e-5)

    print("KERNEL_OK")
</pallas_src>

<mosaic_0001>
module attributes {stable_mosaic.version = 11 : i64} {
  func.func @_gconv_hyper_kernel(%arg0: i32, %arg1: memref<16x16xf32, #tpu.memory_space<vmem>>, %arg2: memref<2x16x32xf32, #tpu.memory_space<vmem>>, %arg3: memref<2x16x32xf32, #tpu.memory_space<vmem>>) attributes {dimension_semantics = [#tpu.dimension_semantics<parallel>], iteration_bounds = array<i64: 4>, scalar_prefetch = 0 : i64, scratch_operands = 0 : i64, tpu.core_type = #tpu.core_type<tc>, window_params = [{pipeline_mode = #tpu.pipeline_mode<synchronous>, transform_indices = @transform_0, window_bounds = array<i64: 16, 16>}, {transform_indices = @transform_1, window_bounds = array<i64: 2, 16, 32>}, {transform_indices = @transform_2, window_bounds = array<i64: 2, 16, 32>}]} {
    %c0 = arith.constant 0 : index
    %c0_0 = arith.constant 0 : index
    %0 = vector.load %arg1[%c0, %c0_0] : memref<16x16xf32, #tpu.memory_space<vmem>>, vector<16x16xf32>
    %1 = vector.shape_cast %0 : vector<16x16xf32> to vector<1x16x16xf32>
    %2 = vector.shape_cast %1 : vector<1x16x16xf32> to vector<1x16x16xf32>
    %3 = vector.broadcast %2 : vector<1x16x16xf32> to vector<2x16x16xf32>
    %c0_1 = arith.constant 0 : index
    %c0_2 = arith.constant 0 : index
    %c0_3 = arith.constant 0 : index
    %4 = vector.load %arg2[%c0_1, %c0_2, %c0_3] : memref<2x16x32xf32, #tpu.memory_space<vmem>>, vector<2x16x32xf32>
    %cst = arith.constant dense<0.000000e+00> : vector<2x16x32xf32>
    %5 = tpu.matmul %3, %4, %cst {dimension_numbers = #tpu.dot_dimension_numbers<[2], [1], [1], [2], [0, 0, 0, 1, 1, 2], [0], [0]>} : vector<2x16x16xf32>, vector<2x16x32xf32>, vector<2x16x32xf32> -> vector<2x16x32xf32>
    %c0_4 = arith.constant 0 : index
    %c0_5 = arith.constant 0 : index
    %c0_6 = arith.constant 0 : index
    %6 = vector.load %arg3[%c0_4, %c0_5, %c0_6] : memref<2x16x32xf32, #tpu.memory_space<vmem>>, vector<2x16x32xf32>
    tpu.vector_store %arg3[%c0_4, %c0_5, %c0_6], %5 {strides = array<i32>} : memref<2x16x32xf32, #tpu.memory_space<vmem>>, vector<2x16x32xf32>,
    return
  }
  func.func @transform_0(%arg0: i32) -> (i32, i32) {
    %c0_i32 = arith.constant 0 : i32
    %c0_i32_0 = arith.constant 0 : i32
    %c0_i32_1 = arith.constant 0 : i32
    return %c0_i32, %c0_i32_0 : i32, i32
  }
  func.func @transform_1(%arg0: i32) -> (i32, i32, i32) {
    %c0_i32 = arith.constant 0 : i32
    %c0_i32_0 = arith.constant 0 : i32
    %c0_i32_1 = arith.constant 0 : i32
    return %arg0, %c0_i32, %c0_i32_0 : i32, i32, i32
  }
  func.func @transform_2(%arg0: i32) -> (i32, i32, i32) {
    %c0_i32 = arith.constant 0 : i32
    %c0_i32_0 = arith.constant 0 : i32
    %c0_i32_1 = arith.constant 0 : i32
    return %arg0, %c0_i32, %c0_i32_0 : i32, i32, i32
  }
}

</mosaic_0001>

<llo_original>
// kernel: tpu_custom_call.1
$region0: #{tpu_custom_call.1}
  #allocation0 [shape = 'u32[]', space=smem, size = 0x4, offset = 0x4, fixed_abs, tag = 'smem constant byte address 0x4 - core index']
  #allocation1 [shape = 'u32[72,128]{1,0:T(1,128)}', space=vmem, size = 0x9000, scoped, tag = 'internal scratch']
  %s0 = inlined_call_operand.hbm [shape: f32[16,16], index: 0, kind: input, shape index: {}]
  %s1 = inlined_call_operand.hbm [shape: f32[8,16,32], index: 1, kind: input, shape index: {}]
  %s2 = inlined_call_operand.hbm [shape: f32[8,16,32], index: 2, kind: output, shape index: {}]
  %s3 = sld [smem:[#allocation0]]
  $region49: #{tpu_custom_call.1} parent=0
    _
  %s5 = ssub.s32 1, %s3
  %s6 = scalar_select 0, %s5, %s3
  $region1: #{tpu_custom_call.1} parent=0
    #allocation2 [shape = 'u8[8192]{0}', space=vmem, size = 0x2000, scoped, tag = 'input window, operand 0, single buffered']
    #allocation3 [shape = 's32[2]{0}', space=sflag, size = 0x8, scoped, tag = 'scoped memory for tpu_custom_call.1']
    #allocation4 [shape = 's32[2]{0}', space=sflag, size = 0x8, scoped, tag = 'scoped memory for tpu_custom_call.1']
    #allocation5 [shape = 'u8[32768]{0}', space=vmem, size = 0x8000, scoped, tag = 'input window, operand 1']
    #allocation6 [shape = 's32[2]{0}', space=sflag, size = 0x8, scoped, tag = 'scoped memory for tpu_custom_call.1']
    #allocation7 [shape = 'u8[32768]{0}', space=vmem, size = 0x8000, scoped, tag = 'output window, operand 0']
    %7 = vsyncpa [#allocation3], 0
    %8 = vsyncpa [#allocation6], 0
    %s9 = scalar_lea.sflag [#allocation6], 1
    %10 = vsyncpa %s9, 0
    %11 = vsyncpa [#allocation4], 0
    %s12 = scalar_lea.sflag [#allocation4], 1
    %13 = vsyncpa %s12, 0
    loop: start=0, step=1, limit=6
    $region2: #{tpu_custom_call.1} parent=1 // loop_pre_header
      _
    $region3: #{tpu_custom_call.1} parent=1 // loop_header
      %s15 = sphi 0, %s19
      %p16 = scmp.ge.s32.totalorder %s15, 6
      %s23 = sphi 0, %s23
      %s25 = sphi 0, %s23
      %s26 = sphi 0, %s25
      %s40 = sphi 0, %s26
      %s46 = sphi 0, %s48
      %s49 = sphi 0, %s46
      %s50 = sphi 0, %s49
      %s66 = sphi 0, %s50
      %s72 = sphi 0, %s74
      %s75 = sphi 0, %s72
      %s76 = sphi 0, %s75
      %s92 = sphi 0, %s76
    $region4: #{tpu_custom_call.1} parent=1 // loop_header_branch
      %18 = sbr.rel (%p16) target = $region8
    $region5: #{tpu_custom_call.1} parent=1 // loop_body
      %s20 = ssub.s32 %s15, 1
      %s21 = ssub.s32 %s15, 2
      %s22 = sadd.s32 %s15, 1
      %s24 = sadd.s32 %s23, 1
      %p27 = scmp.eq.s32.totalorder %s15, 3
      %p28 = scmp.ne.s32.totalorder %s23, %s25
      %p29 = scmp.eq.s32.totalorder %s15, 0
      %p30 = por %p28, %p29
      %p31 = scmp.ne.s32.totalorder %s23, %s25
      %p32 = scmp.eq.s32.totalorder %s20, 3
      %p33 = por %p31, %p32
      %p34 = scmp.ne.s32.totalorder %s25, %s26
      %p35 = scmp.eq.s32.totalorder %s20, 0
      %p36 = por %p34, %p35
      %p37 = scmp.ne.s32.totalorder %s25, %s26
      %p38 = scmp.eq.s32.totalorder %s21, 3
      %p39 = por %p37, %p38
      %p41 = scmp.ne.s32.totalorder %s26, %s40
      %p42 = scmp.eq.s32.totalorder %s21, 0
      %p43 = por %p41, %p42
      %s44 = ssub.s32 %s15, %s22
      %p45 = scmp.eq.s32.totalorder %s44, 0
      %s47 = sadd.s32 %s46, 1
      %s48 = scalar_select %p45, %s46, %s47
      %p51 = pneg %p45
      %p52 = scmp.eq.s32.totalorder %s15, 3
      %p53 = por %p51, %p52
      %p54 = scmp.ne.s32.totalorder %s46, %s49
      %p55 = scmp.eq.s32.totalorder %s15, 0
      %p56 = por %p54, %p55
      %p57 = scmp.ne.s32.totalorder %s46, %s49
      %p58 = scmp.eq.s32.totalorder %s20, 3
      %p59 = por %p57, %p58
      %p60 = scmp.ne.s32.totalorder %s49, %s50
      %p61 = scmp.eq.s32.totalorder %s20, 0
      %p62 = por %p60, %p61
      %p63 = scmp.ne.s32.totalorder %s49, %s50
      %p64 = scmp.eq.s32.totalorder %s21, 3
      %p65 = por %p63, %p64
      %p67 = scmp.ne.s32.totalorder %s50, %s66
      %p68 = scmp.eq.s32.totalorder %s21, 0
      %p69 = por %p67, %p68
      %s70 = ssub.s32 %s15, %s22
      %p71 = scmp.eq.s32.totalorder %s70, 0
      %s73 = sadd.s32 %s72, 1
      %s74 = scalar_select %p71, %s72, %s73
      %p77 = pneg %p71
      %p78 = scmp.eq.s32.totalorder %s15, 3
      %p79 = por %p77, %p78
      %p80 = scmp.ne.s32.totalorder %s72, %s75
      %p81 = scmp.eq.s32.totalorder %s15, 0
      %p82 = por %p80, %p81
      %p83 = scmp.ne.s32.totalorder %s72, %s75
      %p84 = scmp.eq.s32.totalorder %s20, 3
      %p85 = por %p83, %p84
      %p86 = scmp.ne.s32.totalorder %s75, %s76
      %p87 = scmp.eq.s32.totalorder %s20, 0
      %p88 = por %p86, %p87
      %p89 = scmp.ne.s32.totalorder %s75, %s76
      %p90 = scmp.eq.s32.totalorder %s21, 3
      %p91 = por %p89, %p90
      %p93 = scmp.ne.s32.totalorder %s76, %s92
      %p94 = scmp.eq.s32.totalorder %s21, 0
      %p95 = por %p93, %p94
      %p96 = scmp.le.s32.totalorder 1, %s15
      %p97 = scmp.lt.s32.totalorder %s15, 5
      %p98 = pnand %p96, %p97
      %p99 = pneg %p98
      // Predicated region
      $region9: #{tpu_custom_call.1} parent=5 // pred_check
        _
      $region10: #{tpu_custom_call.1} parent=5 // pred_check_branch
        %101 = sbr.rel (%p98) target = $region12
      $region11: #{tpu_custom_call.1} parent=5 // pred_region
        %s102 = ssub.s32 %s15, 1
        // Predicated region
        $region13: #{tpu_custom_call.1} parent=11 // pred_check
          %p103 = pneg %p36
        $region14: #{tpu_custom_call.1} parent=11 // pred_check_branch
          %105 = sbr.rel (%p103) target = $region16
        $region15: #{tpu_custom_call.1} parent=11 // pred_region
          %107 = vsyncadd [#allocation3], 0
          %s108 = sshll.u32 %s0, 4
          %s109 = int_to_ptr.hbm [resolvable:$true] %s108
          %s110 = sshll.u32 [#allocation2], 4
          %s111 = int_to_ptr.vmem [resolvable:$true] %s110
          %116 = dma.hbm_to_vmem [thread:$0]  %s109, 256, %s111, [#allocation3], 128, 128, 8
        $region16: #{tpu_custom_call.1} parent=11 // pred_fallthru
          _
      $region12: #{tpu_custom_call.1} parent=5 // pred_fallthru
        _
      %p117 = scmp.lt.s32.totalorder %s15, 4
      // Predicated region
      $region17: #{tpu_custom_call.1} parent=5 // pred_check
        %p118 = pneg %p117
      $region18: #{tpu_custom_call.1} parent=5 // pred_check_branch
        %120 = sbr.rel (%p118) target = $region20
      $region19: #{tpu_custom_call.1} parent=5 // pred_region
        // Predicated region
        $region21: #{tpu_custom_call.1} parent=19 // pred_check
          %p121 = pneg %p56
        $region22: #{tpu_custom_call.1} parent=19 // pred_check_branch
          %123 = sbr.rel (%p121) target = $region24
        $region23: #{tpu_custom_call.1} parent=19 // pred_region
          %s124 = sand.u32 %s46, 1
          %s125 = scalar_lea.sflag [#allocation6], %s124
          %s126 = sand.u32 %s46, 1
          %s127 = smul.addr %s126, 32
          %s128 = scalar_lea.vmem [#allocation5], %s127
          %s129 = smul.u32 2, %s15
          %131 = vsyncadd %s125, 0
          %s132 = smul.addr %s129, 2
          %s133 = smul.addr %s132, 8
          %s134 = scalar_lea.hbm %s1, %s133
          %s135 = sshll.u32 %s134, 4
          %s136 = int_to_ptr.hbm [resolvable:$true] %s135
          %s137 = sshll.u32 %s128, 4
          %s138 = int_to_ptr.vmem [resolvable:$true] %s137
          %143 = dma.hbm_to_vmem [thread:$0]  %s136, 512, %s138, %s125, 128, 128, 8
        $region24: #{tpu_custom_call.1} parent=19 // pred_fallthru
          _
      $region20: #{tpu_custom_call.1} parent=5 // pred_fallthru
        _
      %p144 = scmp.le.s32.totalorder 1, %s15
      %p145 = scmp.lt.s32.totalorder %s15, 5
      %p146 = pnand %p144, %p145
      %p147 = pneg %p146
      // Predicated region
      $region25: #{tpu_custom_call.1} parent=5 // pred_check
        _
      $region26: #{tpu_custom_call.1} parent=5 // pred_check_branch
        %149 = sbr.rel (%p146) target = $region28
      $region27: #{tpu_custom_call.1} parent=5 // pred_region
        %s150 = ssub.s32 %s15, 1
        // Predicated region
        $region29: #{tpu_custom_call.1} parent=27 // pred_check
          %p151 = pneg %p36
        $region30: #{tpu_custom_call.1} parent=27 // pred_check_branch
          %153 = sbr.rel (%p151) target = $region32
        $region31: #{tpu_custom_call.1} parent=27 // pred_region
          %155 = dma.done [#allocation3], 256
        $region32: #{tpu_custom_call.1} parent=27 // pred_fallthru
          _
        %s156 = sand.u32 %s49, 1
        %s157 = scalar_lea.sflag [#allocation6], %s156
        %s158 = sand.u32 %s49, 1
        %s159 = smul.addr %s158, 32
        %s160 = scalar_lea.vmem [#allocation5], %s159
        // Predicated region
        $region33: #{tpu_custom_call.1} parent=27 // pred_check
          %p161 = pneg %p62
        $region34: #{tpu_custom_call.1} parent=27 // pred_check_branch
          %163 = sbr.rel (%p161) target = $region36
        $region35: #{tpu_custom_call.1} parent=27 // pred_region
          %165 = dma.done %s157, 512
        $region36: #{tpu_custom_call.1} parent=27 // pred_fallthru
          _
        %p166 = pneg %p36
        %p167 = pneg %p33
        %s168 = sand.u32 %s49, 1
        %s169 = scalar_lea.sflag [#allocation6], %s168
        %s170 = sand.u32 %s49, 1
        %s171 = smul.addr %s170, 32
        %s172 = scalar_lea.vmem [#allocation5], %s171
        %p173 = pneg %p62
        %p174 = pneg %p59
        %p175 = pneg %p88
        %p176 = pneg %p85
        %s177 = sand.u32 %s75, 1
        %s178 = scalar_lea.sflag [#allocation4], %s177
        %s179 = sand.u32 %s75, 1
        %s180 = smul.addr %s179, 32
        %s181 = scalar_lea.vmem [#allocation7], %s180
        %s182 = smul.u32 2, %s20
        %s183 = smul.u32 2, %s20
        %v184 = vld [vmem:[#allocation2] sm:$0xff]
        %v185 = vld [vmem:[#allocation2 + $0x8] sm:$0xff]
        %v186 = vld [vmem:[%s160] sm:$0xff]
        %v187 = vld [vmem:[%s160 + $0x8] sm:$0xff]
        %v188 = vld [vmem:[%s160 + $0x10] sm:$0xff]
        %v189 = vld [vmem:[%s160 + $0x18] sm:$0xff]
        %vm190 = vcmask 130048
        %v192 = vsel %vm190, %v184, 0
        %v195 = vsel %vm190, %v185, 0
        %197 = vmatpush.msra.mxu0 0.0
        %198 = vmatpush.msra.mxu0 0.0
        %199 = vmatpush.msra.mxu0 0.0
        %200 = vmatpush.msra.mxu0 0.0
        %201 = vmatpush.msra.mxu0 0.0
        %202 = vmatpush.msra.mxu0 0.0
        %203 = vmatpush.msra.mxu0 0.0
        %204 = vmatpush.msra.mxu0 0.0
        %205 = vmatpush.msra.mxu0 0.0
        %206 = vmatpush.msra.mxu0 0.0
        %207 = vmatpush.msra.mxu0 0.0
        %208 = vmatpush.msra.mxu0 0.0
        %209 = vmatpush.msra.mxu0 0.0
        %210 = vmatpush.msra.mxu0 0.0
        %211 = vmatpush.msra.mxu0 %v187
        %212 = vmatpush.msra.mxu0 %v186
        %213 = vmatmul.f32.gmra.mxu0 %v192
        %v214 = vpop.f32.mrf.mxu0
        %v215 = vadd.f32 0.0, %v214
        %216 = vmatmul.f32.gmra.mxu0 %v195
        %v217 = vpop.f32.mrf.mxu0
        %v218 = vadd.f32 0.0, %v217
        %219 = vdwg.mxu0
        %220 = vmatpush.msra.mxu0 0.0
        %221 = vmatpush.msra.mxu0 0.0
        %222 = vmatpush.msra.mxu0 0.0
        %223 = vmatpush.msra.mxu0 0.0
        %224 = vmatpush.msra.mxu0 0.0
        %225 = vmatpush.msra.mxu0 0.0
        %226 = vmatpush.msra.mxu0 0.0
        %227 = vmatpush.msra.mxu0 0.0
        %228 = vmatpush.msra.mxu0 0.0
        %229 = vmatpush.msra.mxu0 0.0
        %230 = vmatpush.msra.mxu0 0.0
        %231 = vmatpush.msra.mxu0 0.0
        %232 = vmatpush.msra.mxu0 0.0
        %233 = vmatpush.msra.mxu0 0.0
        %234 = vmatpush.msra.mxu0 %v189
        %235 = vmatpush.msra.mxu0 %v188
        %236 = vmatmul.f32.gmra.mxu0 %v192
        %v237 = vpop.f32.mrf.mxu0
        %v238 = vadd.f32 0.0, %v237
        %239 = vmatmul.f32.gmra.mxu0 %v195
        %v240 = vpop.f32.mrf.mxu0
        %v241 = vadd.f32 0.0, %v240
        %242 = vdwg.mxu0
        %vm243 = vcmask 261120
        %244 = vst.msk [vmem:[%s181] sm:$0xff] %vm243, %v215
        %245 = vst.msk [vmem:[%s181 + $0x8] sm:$0xff] %vm243, %v218
        %246 = vst.msk [vmem:[%s181 + $0x10] sm:$0xff] %vm243, %v238
        %247 = vst.msk [vmem:[%s181 + $0x18] sm:$0xff] %vm243, %v241
        %s248 = sand.u32 %s75, 1
        %s249 = scalar_lea.sflag [#allocation4], %s248
        %s250 = sand.u32 %s75, 1
        %s251 = smul.addr %s250, 32
        %s252 = scalar_lea.vmem [#allocation7], %s251
        // Predicated region
        $region37: #{tpu_custom_call.1} parent=27 // pred_check
          %p253 = pneg %p85
        $region38: #{tpu_custom_call.1} parent=27 // pred_check_branch
          %255 = sbr.rel (%p253) target = $region40
        $region39: #{tpu_custom_call.1} parent=27 // pred_region
          %s256 = smul.u32 2, %s20
          %258 = vsyncadd %s249, 0
          %s259 = smul.addr %s256, 2
          %s260 = smul.addr %s259, 8
          %s261 = scalar_lea.hbm %s2, %s260
          %s262 = sshll.u32 %s252, 4
          %s263 = int_to_ptr.vmem [resolvable:$true] %s262
          %s264 = sshll.u32 %s261, 4
          %s265 = int_to_ptr.hbm [resolvable:$true] %s264
          %270 = dma.vmem_to_hbm [thread:$0]  %s263, 512, %s265, %s249, 128, 128, 8
        $region40: #{tpu_custom_call.1} parent=27 // pred_fallthru
          _
      $region28: #{tpu_custom_call.1} parent=5 // pred_fallthru
        _
      %p271 = scmp.le.s32.totalorder 2, %s15
      // Predicated region
      $region41: #{tpu_custom_call.1} parent=5 // pred_check
        %p272 = pneg %p271
      $region42: #{tpu_custom_call.1} parent=5 // pred_check_branch
        %274 = sbr.rel (%p272) target = $region44
      $region43: #{tpu_custom_call.1} parent=5 // pred_region
        %s275 = ssub.s32 %s15, 2
        // Predicated region
        $region45: #{tpu_custom_call.1} parent=43 // pred_check
          %p276 = pneg %p91
        $region46: #{tpu_custom_call.1} parent=43 // pred_check_branch
          %278 = sbr.rel (%p276) target = $region48
        $region47: #{tpu_custom_call.1} parent=43 // pred_region
          %s279 = sand.u32 %s76, 1
          %s280 = scalar_lea.sflag [#allocation4], %s279
          %s281 = sand.u32 %s76, 1
          %s282 = smul.addr %s281, 32
          %s283 = scalar_lea.vmem [#allocation7], %s282
          %285 = dma.done %s280, 512
        $region48: #{tpu_custom_call.1} parent=43 // pred_fallthru
          _
      $region44: #{tpu_custom_call.1} parent=5 // pred_fallthru
        _
    $region6: #{tpu_custom_call.1} parent=1 // loop_footer
      %s19 = sadd.s32 1, %s15
    $region7: #{tpu_custom_call.1} parent=1 // loop_footer_branch
      %14 = sbr.rel target = $region3
    $region8: #{tpu_custom_call.1} parent=1 // loop_exit
      _
    %286 = vsyncpa [#allocation3], 1
    %s287 = scalar_lea.sflag [#allocation3], 1
    %288 = vsyncpa %s287, 1
    %289 = vsyncpa [#allocation6], 1
    %s290 = scalar_lea.sflag [#allocation6], 1
    %291 = vsyncpa %s290, 1
    %292 = vsyncpa [#allocation4], 1
    %s293 = scalar_lea.sflag [#allocation4], 1
    %294 = vsyncpa %s293, 1

</llo_original>
